<compile_context>
chip_gen: v5e
topology: v5e:2x2
jax: 0.10.0
libtpu: 0.0.40
codegen_flags: <defaults>
</compile_context>

<pallas_src>
import math
import functools

import jax
import jax.numpy as jnp
from jax.experimental import pallas as pl
from jax.experimental.pallas import tpu as pltpu  # noqa: F401  (imported per template)

# ---- static module config -------------------------------------------------
D_MODEL = 32
N_HEADS = 4
N_GQA = 2
D_Q = 8           # d_queries == d_keys
D_V = 8
SEQ = 8
BATCH = 2
EPS = 1e-5

DQ_TOT = N_GQA * N_HEADS * D_Q   # cast_queries out features (64)
DK_TOT = N_HEADS * D_Q           # cast_keys out features (32)
DV_TOT = N_HEADS * D_V           # cast_values out features (32)

_HI = jax.lax.Precision.HIGHEST  # reference only


# ---- fused kernel (single invocation, no grid) -----------------------------
def mha_kernel(x_ref, gamma_ref, beta_ref, wqkv_ref, bqkv_ref, wo_ref, bo_ref,
               o_ref, *, n_batch, seq, n_heads):
    nt = n_batch * seq
    d_model = x_ref.shape[-1]

    # LayerNorm over the feature (lane) axis, all N*T rows at once (f32).
    x = x_ref[...].reshape(nt, d_model)
    mean = jnp.mean(x, axis=-1, keepdims=True)
    var = jnp.mean((x - mean) ** 2, axis=-1, keepdims=True)
    xn = (x - mean) * jax.lax.rsqrt(var + EPS) * gamma_ref[...] + beta_ref[...]
    xn_b = xn.astype(jnp.bfloat16)            # cast once, right before the MXU

    # Fused per-head QKV projection: H small 2D MXU matmuls that all consume the SAME
    # LayerNorm vregs (no broadcast materialization).  Weights are (H, D, Dq+Dk+Dv) bf16
    # with the GQA group-sum and the 1/(30*sqrt(Dq)) score scaling folded into the Q block.
    q_parts, k_parts, v_parts = [], [], []
    for h in range(n_heads):
        qkv_h = (jnp.dot(xn_b, wqkv_ref[h], preferred_element_type=jnp.float32)
                 + bqkv_ref[h])                                     # (NT, 24) f32
        q_parts.append(qkv_h[:, :D_Q].reshape(n_batch, seq, D_Q))
        k_parts.append(qkv_h[:, D_Q:2 * D_Q].reshape(n_batch, seq, D_Q))
        v_parts.append(qkv_h[:, 2 * D_Q:].reshape(n_batch, seq, D_V))

    # (H*N, T, d): head-major batch axis; leading-dim regrouping only, no lane movement.
    q = jnp.concatenate(q_parts, axis=0)
    k = jnp.concatenate(k_parts, axis=0)
    v = jnp.concatenate(v_parts, axis=0)

    # Attention: ONE scores einsum / soft-cap / mask / softmax / PV einsum over all
    # (head, batch) pairs.  q already carries the 1/(30*sqrt(Dq)) scaling.
    s = jnp.einsum('bqd,bkd->bqk', q.astype(jnp.bfloat16), k.astype(jnp.bfloat16),
                   preferred_element_type=jnp.float32)              # (H*N, T, T) f32
    s = 30.0 * jnp.tanh(s)                                          # logit soft-cap, |s|<=30
    row = jax.lax.broadcasted_iota(jnp.int32, (seq, seq), 0)
    col = jax.lax.broadcasted_iota(jnp.int32, (seq, seq), 1)
    s = jnp.where((row >= col)[None], s, -jnp.inf)                  # causal mask
    # No max-subtraction: soft-cap bounds logits, exp() cannot overflow in f32.
    p = jnp.exp(s)
    p = p * pl.reciprocal(jnp.sum(p, axis=-1, keepdims=True), approx=False)
    # TODO(synk): dropout omitted (eval mode, p=0); training parity needs pltpu.prng_*.

    ctx = jnp.einsum('bqk,bkd->bqd', p.astype(jnp.bfloat16), v.astype(jnp.bfloat16),
                     preferred_element_type=jnp.float32)            # (H*N, T, Dv) f32

    # Output projection: assemble (N*T, H*Dv) lane-wise (head-major lane blocks match the
    # PyTorch feature layout) and run ONE matmul so the head accumulation happens inside
    # the MXU f32 accumulator.
    ctx_nt = jnp.concatenate(
        [ctx[h * n_batch:(h + 1) * n_batch] for h in range(n_heads)], axis=-1)  # (N,T,H*Dv)
    ctx_nt = ctx_nt.reshape(nt, n_heads * D_V)
    out = (jnp.dot(ctx_nt.astype(jnp.bfloat16), wo_ref[...],
                   preferred_element_type=jnp.float32) + bo_ref[...])           # (NT, D)
    o_ref[...] = out.reshape(n_batch, seq, d_model)


# ---- one-time host-side parameter preparation (hoisted out of the hot path) ----
def prepare_params(wq, bq, wk, bk, wv, bv, wo, bo):
    """Exact algebraic refactors of the PyTorch weights. Call ONCE at parameter-load time."""
    # Fold GQA group-sum and the 1/(30*sqrt(Dq)) score/soft-cap pre-scale into Q weights/bias.
    qscale = 1.0 / (30.0 * math.sqrt(D_Q))
    wq_eff = wq.reshape(D_MODEL, N_GQA, N_HEADS * D_Q).sum(axis=1) * qscale   # (D, H*Dq)
    bq_eff = bq.reshape(N_GQA, N_HEADS * D_Q).sum(axis=0) * qscale            # (H*Dq,)
    # Head-major fused QKV weights (H, D, Dq+Dk+Dv) bf16 and f32 bias (H, 1, Dq+Dk+Dv).
    wq3 = wq_eff.reshape(D_MODEL, N_HEADS, D_Q).transpose(1, 0, 2)
    wk3 = wk.reshape(D_MODEL, N_HEADS, D_Q).transpose(1, 0, 2)
    wv3 = wv.reshape(D_MODEL, N_HEADS, D_V).transpose(1, 0, 2)
    w_qkv = jnp.concatenate([wq3, wk3, wv3], axis=2).astype(jnp.bfloat16)     # (H, D, 24)
    b_qkv = jnp.concatenate([bq_eff.reshape(N_HEADS, 1, D_Q),
                             bk.reshape(N_HEADS, 1, D_Q),
                             bv.reshape(N_HEADS, 1, D_V)], axis=2)            # (H, 1, 24) f32
    # Output projection weights stay (H*Dv, D): rows are head-major / value-minor, which
    # matches the lane layout of the assembled context in the kernel.
    wo_b = wo.astype(jnp.bfloat16)                                            # (32, 32)
    return w_qkv, b_qkv, wo_b, bo


@jax.jit
def mha_forward(x, gamma, beta, w_qkv, b_qkv, wo_b, bo):
    N, T, D = x.shape
    kernel = functools.partial(mha_kernel, n_batch=N, seq=T, n_heads=w_qkv.shape[0])
    return pl.pallas_call(
        kernel,
        out_shape=jax.ShapeDtypeStruct((N, T, D), jnp.float32),
        # No grid: single invocation, all (tiny, ~10 KB) operands resident in VMEM as
        # whole blocks -> no per-step pipeline overhead, single output write-back DMA.
    )(x, gamma, beta, w_qkv, b_qkv, wo_b, bo)


# ---- pure-JAX reference (mirrors the PyTorch forward, full f32) -------------
def reference(x, gamma, beta, wq, bq, wk, bk, wv, bv, wo, bo):
    N, t, D = x.shape
    mean = jnp.mean(x, axis=-1, keepdims=True)
    var = jnp.mean((x - mean) ** 2, axis=-1, keepdims=True)
    xn = (x - mean) / jnp.sqrt(var + EPS) * gamma[0] + beta[0]

    q = jnp.einsum('ntd,df->ntf', xn, wq, precision=_HI) + bq[0]
    k = jnp.einsum('ntd,df->ntf', xn, wk, precision=_HI) + bk[0]
    v = jnp.einsum('ntd,df->ntf', xn, wv, precision=_HI) + bv[0]

    q = q.reshape(N, t, N_GQA, N_HEADS, D_Q).transpose(0, 2, 3, 1, 4)   # N,g,h,t,q
    k = k.reshape(N, t, N_HEADS, D_Q).transpose(0, 2, 1, 3)             # N,h,T,q
    v = v.reshape(N, t, N_HEADS, D_V).transpose(0, 2, 1, 3)             # N,h,T,v

    aw = jnp.einsum('nghtq,nhTq->nhtT', q, k, precision=_HI)
    aw = aw / math.sqrt(D_Q)
    aw = 30.0 * jnp.tanh(aw / 30.0)
    causal = jnp.tril(jnp.ones((t, t), bool))
    aw = jnp.where(causal, aw, -jnp.inf)
    aw = jax.nn.softmax(aw, axis=-1)
    seqs = jnp.einsum('nhtT,nhTv->nhtv', aw, v, precision=_HI)
    seqs = seqs.transpose(0, 2, 1, 3).reshape(N, t, N_HEADS * D_V)
    return jnp.einsum('ntf,fd->ntd', seqs, wo, precision=_HI) + bo[0]


if __name__ == "__main__":
    key = jax.random.PRNGKey(0)
    ks = jax.random.split(key, 12)

    x = jax.random.normal(ks[0], (BATCH, SEQ, D_MODEL), jnp.float32)
    gamma = jnp.ones((1, D_MODEL), jnp.float32) + 0.1 * jax.random.normal(ks[1], (1, D_MODEL))
    beta = 0.1 * jax.random.normal(ks[2], (1, D_MODEL))

    def lin(kw, kb, fan_in, fan_out):
        lim = 1.0 / math.sqrt(fan_in)
        w = jax.random.uniform(kw, (fan_in, fan_out), jnp.float32, -lim, lim)
        b = jax.random.uniform(kb, (1, fan_out), jnp.float32, -lim, lim)
        return w, b

    wq, bq = lin(ks[3], ks[4], D_MODEL, DQ_TOT)
    wk, bk = lin(ks[5], ks[6], D_MODEL, DK_TOT)
    wv, bv = lin(ks[7], ks[8], D_MODEL, DV_TOT)
    wo, bo = lin(ks[9], ks[10], DV_TOT, D_MODEL)

    # One-time weight preparation (parameter-load time, NOT in the per-call hot path).
    w_qkv, b_qkv, wo_b, bo_p = prepare_params(wq, bq, wk, bk, wv, bv, wo, bo)
    w_qkv, b_qkv, wo_b, bo_p = jax.block_until_ready((w_qkv, b_qkv, wo_b, bo_p))

    out = jax.block_until_ready(mha_forward(x, gamma, beta, w_qkv, b_qkv, wo_b, bo_p))
    ref = jax.block_until_ready(reference(x, gamma, beta, wq, bq, wk, bk, wv, bv, wo, bo))

    assert out.shape == (BATCH, SEQ, D_MODEL)
    # Tolerance covers single-pass bf16 MXU matmuls in the kernel vs. the full-f32
    # HIGHEST-precision reference.
    err = float(jnp.max(jnp.abs(out - ref)))
    assert jnp.allclose(out, ref, rtol=1e-2, atol=1e-2), err

    print("KERNEL_OK")
</pallas_src>

<mosaic_0001>
module attributes {stable_mosaic.version = 11 : i64} {
  func.func @mha_kernel(%arg0: memref<2x8x32xf32, #tpu.memory_space<vmem>>, %arg1: memref<1x32xf32, #tpu.memory_space<vmem>>, %arg2: memref<1x32xf32, #tpu.memory_space<vmem>>, %arg3: memref<4x32x24xbf16, #tpu.memory_space<vmem>>, %arg4: memref<4x1x24xf32, #tpu.memory_space<vmem>>, %arg5: memref<32x32xbf16, #tpu.memory_space<vmem>>, %arg6: memref<1x32xf32, #tpu.memory_space<vmem>>, %arg7: memref<2x8x32xf32, #tpu.memory_space<vmem>>) attributes {dimension_semantics = [], scalar_prefetch = 0 : i64, scratch_operands = 0 : i64, tpu.core_type = #tpu.core_type<tc>} {
    %c0 = arith.constant 0 : index
    %c0_0 = arith.constant 0 : index
    %c0_1 = arith.constant 0 : index
    %0 = vector.load %arg0[%c0, %c0_0, %c0_1] : memref<2x8x32xf32, #tpu.memory_space<vmem>>, vector<2x8x32xf32>
    %1 = vector.shape_cast %0 : vector<2x8x32xf32> to vector<16x32xf32>
    %cst = arith.constant dense<0.000000e+00> : vector<16xf32>
    %2 = vector.multi_reduction <add>, %1, %cst [1] : vector<16x32xf32> to vector<16xf32>
    %3 = vector.shape_cast %2 : vector<16xf32> to vector<16x1xf32>
    %cst_2 = arith.constant 3.200000e+01 : f32
    %4 = vector.broadcast %cst_2 : f32 to vector<16x1xf32>
    %5 = arith.divf %3, %4 : vector<16x1xf32>
    %6 = vector.broadcast %5 : vector<16x1xf32> to vector<16x32xf32>
    %7 = arith.subf %1, %6 : vector<16x32xf32>
    %8 = arith.mulf %7, %7 : vector<16x32xf32>
    %cst_3 = arith.constant dense<0.000000e+00> : vector<16xf32>
    %9 = vector.multi_reduction <add>, %8, %cst_3 [1] : vector<16x32xf32> to vector<16xf32>
    %10 = vector.shape_cast %9 : vector<16xf32> to vector<16x1xf32>
    %cst_4 = arith.constant 3.200000e+01 : f32
    %11 = vector.broadcast %cst_4 : f32 to vector<16x1xf32>
    %12 = arith.divf %10, %11 : vector<16x1xf32>
    %13 = vector.broadcast %5 : vector<16x1xf32> to vector<16x32xf32>
    %14 = arith.subf %1, %13 : vector<16x32xf32>
    %cst_5 = arith.constant 9.99999974E-6 : f32
    %15 = vector.broadcast %cst_5 : f32 to vector<16x1xf32>
    %16 = arith.addf %12, %15 : vector<16x1xf32>
    %17 = math.rsqrt %16 : vector<16x1xf32>
    %18 = vector.broadcast %17 : vector<16x1xf32> to vector<16x32xf32>
    %19 = arith.mulf %14, %18 : vector<16x32xf32>
    %c0_6 = arith.constant 0 : index
    %c0_7 = arith.constant 0 : index
    %20 = vector.load %arg1[%c0_6, %c0_7] : memref<1x32xf32, #tpu.memory_space<vmem>>, vector<1x32xf32>
    %21 = vector.broadcast %20 : vector<1x32xf32> to vector<16x32xf32>
    %22 = arith.mulf %19, %21 : vector<16x32xf32>
    %c0_8 = arith.constant 0 : index
    %c0_9 = arith.constant 0 : index
    %23 = vector.load %arg2[%c0_8, %c0_9] : memref<1x32xf32, #tpu.memory_space<vmem>>, vector<1x32xf32>
    %24 = vector.broadcast %23 : vector<1x32xf32> to vector<16x32xf32>
    %25 = arith.addf %22, %24 : vector<16x32xf32>
    %26 = arith.truncf %25 : vector<16x32xf32> to vector<16x32xbf16>
    %c0_10 = arith.constant 0 : index
    %c0_11 = arith.constant 0 : index
    %c0_12 = arith.constant 0 : index
    %27 = vector.load %arg3[%c0_10, %c0_11, %c0_12] : memref<4x32x24xbf16, #tpu.memory_space<vmem>>, vector<1x32x24xbf16>
    %28 = vector.shape_cast %27 : vector<1x32x24xbf16> to vector<32x24xbf16>
    %cst_13 = arith.constant dense<0.000000e+00> : vector<16x24xf32>
    %29 = tpu.matmul %26, %28, %cst_13 {dimension_numbers = #tpu.dot_dimension_numbers<[1], [0], [0], [1], [0, 0, 1, 1], [], []>} : vector<16x32xbf16>, vector<32x24xbf16>, vector<16x24xf32> -> vector<16x24xf32>
    %c0_14 = arith.constant 0 : index
    %c0_15 = arith.constant 0 : index
    %c0_16 = arith.constant 0 : index
    %30 = vector.load %arg4[%c0_14, %c0_15, %c0_16] : memref<4x1x24xf32, #tpu.memory_space<vmem>>, vector<1x1x24xf32>
    %31 = vector.shape_cast %30 : vector<1x1x24xf32> to vector<1x24xf32>
    %32 = vector.broadcast %31 : vector<1x24xf32> to vector<16x24xf32>
    %33 = arith.addf %29, %32 : vector<16x24xf32>
    %34 = vector.extract_strided_slice %33 {offsets = [0, 0], sizes = [16, 8], strides = [1, 1]} : vector<16x24xf32> to vector<16x8xf32>
    %35 = vector.shape_cast %34 : vector<16x8xf32> to vector<2x8x8xf32>
    %36 = vector.extract_strided_slice %33 {offsets = [0, 8], sizes = [16, 8], strides = [1, 1]} : vector<16x24xf32> to vector<16x8xf32>
    %37 = vector.shape_cast %36 : vector<16x8xf32> to vector<2x8x8xf32>
    %38 = vector.extract_strided_slice %33 {offsets = [0, 16], sizes = [16, 8], strides = [1, 1]} : vector<16x24xf32> to vector<16x8xf32>
    %39 = vector.shape_cast %38 : vector<16x8xf32> to vector<2x8x8xf32>
    %c1 = arith.constant 1 : index
    %c0_17 = arith.constant 0 : index
    %c0_18 = arith.constant 0 : index
    %40 = vector.load %arg3[%c1, %c0_17, %c0_18] : memref<4x32x24xbf16, #tpu.memory_space<vmem>>, vector<1x32x24xbf16>
    %41 = vector.shape_cast %40 : vector<1x32x24xbf16> to vector<32x24xbf16>
    %cst_19 = arith.constant dense<0.000000e+00> : vector<16x24xf32>
    %42 = tpu.matmul %26, %41, %cst_19 {dimension_numbers = #tpu.dot_dimension_numbers<[1], [0], [0], [1], [0, 0, 1, 1], [], []>} : vector<16x32xbf16>, vector<32x24xbf16>, vector<16x24xf32> -> vector<16x24xf32>
    %c1_20 = arith.constant 1 : index
    %c0_21 = arith.constant 0 : index
    %c0_22 = arith.constant 0 : index
    %43 = vector.load %arg4[%c1_20, %c0_21, %c0_22] : memref<4x1x24xf32, #tpu.memory_space<vmem>>, vector<1x1x24xf32>
    %44 = vector.shape_cast %43 : vector<1x1x24xf32> to vector<1x24xf32>
    %45 = vector.broadcast %44 : vector<1x24xf32> to vector<16x24xf32>
    %46 = arith.addf %42, %45 : vector<16x24xf32>
    %47 = vector.extract_strided_slice %46 {offsets = [0, 0], sizes = [16, 8], strides = [1, 1]} : vector<16x24xf32> to vector<16x8xf32>
    %48 = vector.shape_cast %47 : vector<16x8xf32> to vector<2x8x8xf32>
    %49 = vector.extract_strided_slice %46 {offsets = [0, 8], sizes = [16, 8], strides = [1, 1]} : vector<16x24xf32> to vector<16x8xf32>
    %50 = vector.shape_cast %49 : vector<16x8xf32> to vector<2x8x8xf32>
    %51 = vector.extract_strided_slice %46 {offsets = [0, 16], sizes = [16, 8], strides = [1, 1]} : vector<16x24xf32> to vector<16x8xf32>
    %52 = vector.shape_cast %51 : vector<16x8xf32> to vector<2x8x8xf32>
    %c2 = arith.constant 2 : index
    %c0_23 = arith.constant 0 : index
    %c0_24 = arith.constant 0 : index
    %53 = vector.load %arg3[%c2, %c0_23, %c0_24] : memref<4x32x24xbf16, #tpu.memory_space<vmem>>, vector<1x32x24xbf16>
    %54 = vector.shape_cast %53 : vector<1x32x24xbf16> to vector<32x24xbf16>
    %cst_25 = arith.constant dense<0.000000e+00> : vector<16x24xf32>
    %55 = tpu.matmul %26, %54, %cst_25 {dimension_numbers = #tpu.dot_dimension_numbers<[1], [0], [0], [1], [0, 0, 1, 1], [], []>} : vector<16x32xbf16>, vector<32x24xbf16>, vector<16x24xf32> -> vector<16x24xf32>
    %c2_26 = arith.constant 2 : index
    %c0_27 = arith.constant 0 : index
    %c0_28 = arith.constant 0 : index
    %56 = vector.load %arg4[%c2_26, %c0_27, %c0_28] : memref<4x1x24xf32, #tpu.memory_space<vmem>>, vector<1x1x24xf32>
    %57 = vector.shape_cast %56 : vector<1x1x24xf32> to vector<1x24xf32>
    %58 = vector.broadcast %57 : vector<1x24xf32> to vector<16x24xf32>
    %59 = arith.addf %55, %58 : vector<16x24xf32>
    %60 = vector.extract_strided_slice %59 {offsets = [0, 0], sizes = [16, 8], strides = [1, 1]} : vector<16x24xf32> to vector<16x8xf32>
    %61 = vector.shape_cast %60 : vector<16x8xf32> to vector<2x8x8xf32>
    %62 = vector.extract_strided_slice %59 {offsets = [0, 8], sizes = [16, 8], strides = [1, 1]} : vector<16x24xf32> to vector<16x8xf32>
    %63 = vector.shape_cast %62 : vector<16x8xf32> to vector<2x8x8xf32>
    %64 = vector.extract_strided_slice %59 {offsets = [0, 16], sizes = [16, 8], strides = [1, 1]} : vector<16x24xf32> to vector<16x8xf32>
    %65 = vector.shape_cast %64 : vector<16x8xf32> to vector<2x8x8xf32>
    %c3 = arith.constant 3 : index
    %c0_29 = arith.constant 0 : index
    %c0_30 = arith.constant 0 : index
    %66 = vector.load %arg3[%c3, %c0_29, %c0_30] : memref<4x32x24xbf16, #tpu.memory_space<vmem>>, vector<1x32x24xbf16>
    %67 = vector.shape_cast %66 : vector<1x32x24xbf16> to vector<32x24xbf16>
    %cst_31 = arith.constant dense<0.000000e+00> : vector<16x24xf32>
    %68 = tpu.matmul %26, %67, %cst_31 {dimension_numbers = #tpu.dot_dimension_numbers<[1], [0], [0], [1], [0, 0, 1, 1], [], []>} : vector<16x32xbf16>, vector<32x24xbf16>, vector<16x24xf32> -> vector<16x24xf32>
    %c3_32 = arith.constant 3 : index
    %c0_33 = arith.constant 0 : index
    %c0_34 = arith.constant 0 : index
    %69 = vector.load %arg4[%c3_32, %c0_33, %c0_34] : memref<4x1x24xf32, #tpu.memory_space<vmem>>, vector<1x1x24xf32>
    %70 = vector.shape_cast %69 : vector<1x1x24xf32> to vector<1x24xf32>
    %71 = vector.broadcast %70 : vector<1x24xf32> to vector<16x24xf32>
    %72 = arith.addf %68, %71 : vector<16x24xf32>
    %73 = vector.extract_strided_slice %72 {offsets = [0, 0], sizes = [16, 8], strides = [1, 1]} : vector<16x24xf32> to vector<16x8xf32>
    %74 = vector.shape_cast %73 : vector<16x8xf32> to vector<2x8x8xf32>
    %75 = vector.extract_strided_slice %72 {offsets = [0, 8], sizes = [16, 8], strides = [1, 1]} : vector<16x24xf32> to vector<16x8xf32>
    %76 = vector.shape_cast %75 : vector<16x8xf32> to vector<2x8x8xf32>
    %77 = vector.extract_strided_slice %72 {offsets = [0, 16], sizes = [16, 8], strides = [1, 1]} : vector<16x24xf32> to vector<16x8xf32>
    %78 = vector.shape_cast %77 : vector<16x8xf32> to vector<2x8x8xf32>
    %79 = tpu.concatenate %35, %48, %61, %74 in 0 : vector<2x8x8xf32>, vector<2x8x8xf32>, vector<2x8x8xf32>, vector<2x8x8xf32> -> vector<8x8x8xf32>
    %80 = tpu.concatenate %37, %50, %63, %76 in 0 : vector<2x8x8xf32>, vector<2x8x8xf32>, vector<2x8x8xf32>, vector<2x8x8xf32> -> vector<8x8x8xf32>
    %81 = tpu.concatenate %39, %52, %65, %78 in 0 : vector<2x8x8xf32>, vector<2x8x8xf32>, vector<2x8x8xf32>, vector<2x8x8xf32> -> vector<8x8x8xf32>
    %82 = arith.truncf %79 : vector<8x8x8xf32> to vector<8x8x8xbf16>
    %83 = arith.truncf %80 : vector<8x8x8xf32> to vector<8x8x8xbf16>
    "tpu.trace_start"() <{level = 10 : i32, message = "bqd,bkd->bqk"}> : () -> ()
    %cst_35 = arith.constant dense<0.000000e+00> : vector<8x8x8xf32>
    %84 = tpu.matmul %82, %83, %cst_35 {dimension_numbers = #tpu.dot_dimension_numbers<[2], [2], [1], [1], [0, 0, 0, 1, 1, 1], [0], [0]>} : vector<8x8x8xbf16>, vector<8x8x8xbf16>, vector<8x8x8xf32> -> vector<8x8x8xf32>
    "tpu.trace_stop"() : () -> ()
    %85 = math.tanh %84 : vector<8x8x8xf32>
    %cst_36 = arith.constant 3.000000e+01 : f32
    %86 = vector.broadcast %cst_36 : f32 to vector<8x8x8xf32>
    %87 = arith.mulf %86, %85 : vector<8x8x8xf32>
    %88 = tpu.iota {dimensions = array<i32: 0>} : vector<8x8xi32>
    %89 = tpu.iota {dimensions = array<i32: 1>} : vector<8x8xi32>
    %90 = arith.cmpi sge, %88, %89 : vector<8x8xi32>
    %91 = vector.shape_cast %90 : vector<8x8xi1> to vector<1x8x8xi1>
    %cst_37 = arith.constant 0xFF800000 : f32
    %92 = vector.shape_cast %91 : vector<1x8x8xi1> to vector<1x8x8xi1>
    %93 = vector.broadcast %92 : vector<1x8x8xi1> to vector<8x8x8xi1>
    %94 = vector.broadcast %cst_37 : f32 to vector<8x8x8xf32>
    %95 = arith.select %93, %87, %94 : vector<8x8x8xi1>, vector<8x8x8xf32>
    %96 = math.exp %95 : vector<8x8x8xf32>
    %cst_38 = arith.constant dense<0.000000e+00> : vector<8x8xf32>
    %97 = vector.multi_reduction <add>, %96, %cst_38 [2] : vector<8x8x8xf32> to vector<8x8xf32>
    %98 = vector.shape_cast %97 : vector<8x8xf32> to vector<8x8x1xf32>
    %99 = tpu.reciprocal %98 : vector<8x8x1xf32> -> vector<8x8x1xf32>
    %100 = vector.broadcast %99 : vector<8x8x1xf32> to vector<8x8x8xf32>
    %101 = arith.mulf %96, %100 : vector<8x8x8xf32>
    %102 = arith.truncf %101 : vector<8x8x8xf32> to vector<8x8x8xbf16>
    %103 = arith.truncf %81 : vector<8x8x8xf32> to vector<8x8x8xbf16>
    "tpu.trace_start"() <{level = 10 : i32, message = "bqk,bkd->bqd"}> : () -> ()
    %cst_39 = arith.constant dense<0.000000e+00> : vector<8x8x8xf32>
    %104 = tpu.matmul %102, %103, %cst_39 {dimension_numbers = #tpu.dot_dimension_numbers<[2], [1], [1], [2], [0, 0, 0, 1, 1, 2], [0], [0]>} : vector<8x8x8xbf16>, vector<8x8x8xbf16>, vector<8x8x8xf32> -> vector<8x8x8xf32>
    "tpu.trace_stop"() : () -> ()
    %105 = vector.extract_strided_slice %104 {offsets = [0, 0, 0], sizes = [2, 8, 8], strides = [1, 1, 1]} : vector<8x8x8xf32> to vector<2x8x8xf32>
    %106 = vector.extract_strided_slice %104 {offsets = [2, 0, 0], sizes = [2, 8, 8], strides = [1, 1, 1]} : vector<8x8x8xf32> to vector<2x8x8xf32>
    %107 = vector.extract_strided_slice %104 {offsets = [4, 0, 0], sizes = [2, 8, 8], strides = [1, 1, 1]} : vector<8x8x8xf32> to vector<2x8x8xf32>
    %108 = vector.extract_strided_slice %104 {offsets = [6, 0, 0], sizes = [2, 8, 8], strides = [1, 1, 1]} : vector<8x8x8xf32> to vector<2x8x8xf32>
    %109 = tpu.concatenate %105, %106, %107, %108 in 2 : vector<2x8x8xf32>, vector<2x8x8xf32>, vector<2x8x8xf32>, vector<2x8x8xf32> -> vector<2x8x32xf32>
    %110 = vector.shape_cast %109 : vector<2x8x32xf32> to vector<16x32xf32>
    %111 = arith.truncf %110 : vector<16x32xf32> to vector<16x32xbf16>
    %c0_40 = arith.constant 0 : index
    %c0_41 = arith.constant 0 : index
    %112 = vector.load %arg5[%c0_40, %c0_41] : memref<32x32xbf16, #tpu.memory_space<vmem>>, vector<32x32xbf16>
    %cst_42 = arith.constant dense<0.000000e+00> : vector<16x32xf32>
    %113 = tpu.matmul %111, %112, %cst_42 {dimension_numbers = #tpu.dot_dimension_numbers<[1], [0], [0], [1], [0, 0, 1, 1], [], []>} : vector<16x32xbf16>, vector<32x32xbf16>, vector<16x32xf32> -> vector<16x32xf32>
    %c0_43 = arith.constant 0 : index
    %c0_44 = arith.constant 0 : index
    %114 = vector.load %arg6[%c0_43, %c0_44] : memref<1x32xf32, #tpu.memory_space<vmem>>, vector<1x32xf32>
    %115 = vector.broadcast %114 : vector<1x32xf32> to vector<16x32xf32>
    %116 = arith.addf %113, %115 : vector<16x32xf32>
    %117 = vector.shape_cast %116 : vector<16x32xf32> to vector<2x8x32xf32>
    %c0_45 = arith.constant 0 : index
    %c0_46 = arith.constant 0 : index
    %c0_47 = arith.constant 0 : index
    %118 = vector.load %arg7[%c0_45, %c0_46, %c0_47] : memref<2x8x32xf32, #tpu.memory_space<vmem>>, vector<2x8x32xf32>
    tpu.vector_store %arg7[%c0_45, %c0_46, %c0_47], %117 {strides = array<i32>} : memref<2x8x32xf32, #tpu.memory_space<vmem>>, vector<2x8x32xf32>,
    return
  }
}

</mosaic_0001>

<llo_original>
// kernel: mha_forward.1
$region0: #{mha_forward.1}
  #allocation0 [shape = 'u32[]', space=smem, size = 0x4, offset = 0x4, fixed_abs, tag = 'smem constant byte address 0x4 - core index']
  #allocation1 [shape = 'u32[72,128]{1,0:T(1,128)}', space=vmem, size = 0x9000, scoped, tag = 'internal scratch']
  %s0 = inlined_call_operand.vmem [shape: f32[2,8,32], index: 0, kind: input, shape index: {}]
  %s1 = inlined_call_operand.vmem [shape: f32[1,32], index: 1, kind: input, shape index: {}]
  %s2 = inlined_call_operand.vmem [shape: f32[1,32], index: 2, kind: input, shape index: {}]
  %s3 = inlined_call_operand.vmem [shape: bf16[4,32,24], index: 3, kind: input, shape index: {}]
  %s4 = inlined_call_operand.vmem [shape: f32[4,1,24], index: 4, kind: input, shape index: {}]
  %s5 = inlined_call_operand.vmem [shape: bf16[32,32], index: 5, kind: input, shape index: {}]
  %s6 = inlined_call_operand.vmem [shape: f32[1,32], index: 6, kind: input, shape index: {}]
  %s7 = inlined_call_operand.hbm [shape: f32[2,8,32], index: 7, kind: output, shape index: {}]
  %s8 = sld [smem:[#allocation0]]
  $region38: #{mha_forward.1} parent=0
    _
  %s10 = ssub.s32 1, %s8
  %s11 = scalar_select 0, %s10, %s8
  $region1: #{mha_forward.1} parent=0
    #allocation2 [shape = 'u8[8192]{0}', space=vmem, size = 0x2000, scoped, tag = 'output window, operand 0, single buffered']
    #allocation3 [shape = 's32[1]{0}', space=sflag, size = 0x4, scoped, tag = 'scoped memory for mha_forward.1']
    %12 = vsyncpa [#allocation3], 0
    // Predicated region
    $region2: #{mha_forward.1} parent=1 // pred_check
      _
    $region3: #{mha_forward.1} parent=1 // pred_check_branch
      %14 = sbr.rel (0) target = $region5
    $region4: #{mha_forward.1} parent=1 // pred_region
      _
    $region5: #{mha_forward.1} parent=1 // pred_fallthru
      _
    // Predicated region
    $region6: #{mha_forward.1} parent=1 // pred_check
      _
    $region7: #{mha_forward.1} parent=1 // pred_check_branch
      %16 = sbr.rel (0) target = $region9
    $region8: #{mha_forward.1} parent=1 // pred_region
      _
    $region9: #{mha_forward.1} parent=1 // pred_fallthru
      _
    // Predicated region
    $region10: #{mha_forward.1} parent=1 // pred_check
      _
    $region11: #{mha_forward.1} parent=1 // pred_check_branch
      %18 = sbr.rel (0) target = $region13
    $region12: #{mha_forward.1} parent=1 // pred_region
      _
    $region13: #{mha_forward.1} parent=1 // pred_fallthru
      _
    // Predicated region
    $region14: #{mha_forward.1} parent=1 // pred_check
      _
    $region15: #{mha_forward.1} parent=1 // pred_check_branch
      %20 = sbr.rel (0) target = $region17
    $region16: #{mha_forward.1} parent=1 // pred_region
      _
    $region17: #{mha_forward.1} parent=1 // pred_fallthru
      _
    // Predicated region
    $region18: #{mha_forward.1} parent=1 // pred_check
      _
    $region19: #{mha_forward.1} parent=1 // pred_check_branch
      %22 = sbr.rel (0) target = $region21
    $region20: #{mha_forward.1} parent=1 // pred_region
      _
    $region21: #{mha_forward.1} parent=1 // pred_fallthru
      _
    // Predicated region
    $region22: #{mha_forward.1} parent=1 // pred_check
      _
    $region23: #{mha_forward.1} parent=1 // pred_check_branch
      %24 = sbr.rel (0) target = $region25
    $region24: #{mha_forward.1} parent=1 // pred_region
      _
    $region25: #{mha_forward.1} parent=1 // pred_fallthru
      _
    // Predicated region
    $region26: #{mha_forward.1} parent=1 // pred_check
      _
    $region27: #{mha_forward.1} parent=1 // pred_check_branch
      %26 = sbr.rel (0) target = $region29
    $region28: #{mha_forward.1} parent=1 // pred_region
      _
    $region29: #{mha_forward.1} parent=1 // pred_fallthru
      _
    %v28 = vld [vmem:[%s0] sm:$0xff]
    %v29 = vld [vmem:[%s0 + $0x8] sm:$0xff]
    %vm30 = vcmask 261120
    %v31 = vsel %vm30, %v28, 0.0
    %32 = vadd.xlane.f32.xlu0 %v31
    %v33 = vpop.xlane.xlu0 %32
    %v34 = vsel %vm30, %v29, 0.0
    %35 = vadd.xlane.f32.xlu0 %v34
    %v36 = vpop.xlane.xlu0 %35
    %v37 = vrcp.pop 32.0
    %v38 = vmul.f32 32.0, %v37
    %v39 = vsub.f32 1.0, %v38
    %v40 = vmul.f32 %v37, %v39
    %v41 = vadd.f32 %v37, %v40
    %vm42 = vweird.f32 %v37
    %v43 = vsel %vm42, %v37, %v41
    %v44 = vmul.f32 %v33, %v43
    %v45 = vmul.f32 %v36, %v43
    %v46 = vsub.f32 %v28, %v44
    %v47 = vsub.f32 %v29, %v45
    %v48 = vmul.f32 %v46, %v46
    %v49 = vmul.f32 %v47, %v47
    %v50 = vsel %vm30, %v48, 0.0
    %51 = vadd.xlane.f32.xlu0 %v50
    %v52 = vpop.xlane.xlu0 %51
    %v53 = vsel %vm30, %v49, 0.0
    %54 = vadd.xlane.f32.xlu0 %v53
    %v55 = vpop.xlane.xlu0 %54
    %v56 = vmul.f32 %v52, %v43
    %v57 = vmul.f32 %v55, %v43
    %v58 = vadd.f32 %v56, 1e-05
    %v59 = vadd.f32 %v57, 1e-05
    %v60 = vrsqrt.pop %v58
    %v61 = vmul.f32 %v60, %v58
    %v62 = vmul.f32 %v61, %v60
    %v63 = vmul.f32 0.5, %v62
    %v64 = vsub.f32 1.5, %v63
    %v65 = vmul.f32 %v60, %v64
    %vm66 = vweird.f32 %v58
    %vm67 = vweird.f32 %v60
    %vm68 = vmor %vm66, %vm67
    %v69 = vsel %vm68, %v60, %v65
    %v70 = vrsqrt.pop %v59
    %v71 = vmul.f32 %v70, %v59
    %v72 = vmul.f32 %v71, %v70
    %v73 = vmul.f32 0.5, %v72
    %v74 = vsub.f32 1.5, %v73
    %v75 = vmul.f32 %v70, %v74
    %vm76 = vweird.f32 %v59
    %vm77 = vweird.f32 %v70
    %vm78 = vmor %vm76, %vm77
    %v79 = vsel %vm78, %v70, %v75
    %v80 = vmul.f32 %v46, %v69
    %v81 = vmul.f32 %v47, %v79
    %v82 = vld [vmem:[%s1] sm:$0x1]
    %v84 = vperm.slane %v82, 0
    %v86 = vmul.f32 %v80, %v84
    %v87 = vmul.f32 %v81, %v84
    %v88 = vld [vmem:[%s2] sm:$0x1]
    %v90 = vperm.slane %v88, 0
    %v92 = vadd.f32 %v86, %v90
    %v93 = vadd.f32 %v87, %v90
    %v94 = vpack.c.bf16 %v93, %v92
    %v95 = vld [vmem:[%s3] sm:$0xf]
    %v96 = vld [vmem:[%s3 + $0x4] sm:$0xf]
    %v97 = vld [vmem:[%s3 + $0x8] sm:$0xf]
    %v98 = vld [vmem:[%s3 + $0xc] sm:$0xf]
    %v99 = vld [vmem:[%s4] sm:$0x1]
    %v101 = vperm.slane %v99, 0
    %v107 = vunpack.c.l.b16 %v95
    %v108 = vunpack.c.l.b16 %v96
    %v109 = vunpack.c.l.b16 %v97
    %v110 = vunpack.c.l.b16 %v98
    %v111 = vpack.c.b16 %v108, %v107
    %v112 = vpack.c.b16 %v110, %v109
    %v116 = vsel %vm30, %v94, 0
    %118 = vmatpush.bf16.msra.mxu0 0
    %119 = vmatpush.bf16.msra.mxu0 0
    %120 = vmatpush.bf16.msra.mxu0 0
    %121 = vmatpush.bf16.msra.mxu0 0
    %122 = vmatpush.bf16.msra.mxu0 0
    %123 = vmatpush.bf16.msra.mxu0 0
    %124 = vmatpush.bf16.msra.mxu0 %v112
    %125 = vmatpush.bf16.msra.mxu0 %v111
    %126 = vmatmul.bf16.gmra.mxu0 %v116
    %v127 = vpop.f32.mrf.mxu0
    %v128 = vadd.f32 %v101, %v127
    %v129 = vpop.f32.mrf.mxu0
    %v130 = vadd.f32 %v101, %v129
    %131 = vdwg.mxu0
    %s132 = scalar_lea.vmem %s3, 16
    %v133 = vld [vmem:[%s132] sm:$0xf]
    %v134 = vld [vmem:[%s132 + $0x4] sm:$0xf]
    %v135 = vld [vmem:[%s132 + $0x8] sm:$0xf]
    %v136 = vld [vmem:[%s132 + $0xc] sm:$0xf]
    %s137 = scalar_lea.vmem %s4, 1
    %v138 = vld [vmem:[%s137] sm:$0x1]
    %v140 = vperm.slane %v138, 0
    %v146 = vunpack.c.l.b16 %v133
    %v147 = vunpack.c.l.b16 %v134
    %v148 = vunpack.c.l.b16 %v135
    %v149 = vunpack.c.l.b16 %v136
    %v150 = vpack.c.b16 %v147, %v146
    %v151 = vpack.c.b16 %v149, %v148
    %154 = vmatpush.bf16.msra.mxu0 0
    %155 = vmatpush.bf16.msra.mxu0 0
    %156 = vmatpush.bf16.msra.mxu0 0
    %157 = vmatpush.bf16.msra.mxu0 0
    %158 = vmatpush.bf16.msra.mxu0 0
    %159 = vmatpush.bf16.msra.mxu0 0
    %160 = vmatpush.bf16.msra.mxu0 %v151
    %161 = vmatpush.bf16.msra.mxu0 %v150
    %162 = vmatmul.bf16.gmra.mxu0 %v116
    %v163 = vpop.f32.mrf.mxu0
    %v164 = vadd.f32 %v140, %v163
    %v165 = vpop.f32.mrf.mxu0
    %v166 = vadd.f32 %v140, %v165
    %167 = vdwg.mxu0
    %s168 = scalar_lea.vmem %s3, 32
    %v169 = vld [vmem:[%s168] sm:$0xf]
    %v170 = vld [vmem:[%s168 + $0x4] sm:$0xf]
    %v171 = vld [vmem:[%s168 + $0x8] sm:$0xf]
    %v172 = vld [vmem:[%s168 + $0xc] sm:$0xf]
    %s173 = scalar_lea.vmem %s4, 2
    %v174 = vld [vmem:[%s173] sm:$0x1]
    %v176 = vperm.slane %v174, 0
    %v182 = vunpack.c.l.b16 %v169
    %v183 = vunpack.c.l.b16 %v170
    %v184 = vunpack.c.l.b16 %v171
    %v185 = vunpack.c.l.b16 %v172
    %v186 = vpack.c.b16 %v183, %v182
    %v187 = vpack.c.b16 %v185, %v184
    %190 = vmatpush.bf16.msra.mxu0 0
    %191 = vmatpush.bf16.msra.mxu0 0
    %192 = vmatpush.bf16.msra.mxu0 0
    %193 = vmatpush.bf16.msra.mxu0 0
    %194 = vmatpush.bf16.msra.mxu0 0
    %195 = vmatpush.bf16.msra.mxu0 0
    %196 = vmatpush.bf16.msra.mxu0 %v187
    %197 = vmatpush.bf16.msra.mxu0 %v186
    %198 = vmatmul.bf16.gmra.mxu0 %v116
    %v199 = vpop.f32.mrf.mxu0
    %v200 = vadd.f32 %v176, %v199
    %v201 = vpop.f32.mrf.mxu0
    %v202 = vadd.f32 %v176, %v201
    %203 = vdwg.mxu0
    %s204 = scalar_lea.vmem %s3, 48
    %v205 = vld [vmem:[%s204] sm:$0xf]
    %v206 = vld [vmem:[%s204 + $0x4] sm:$0xf]
    %v207 = vld [vmem:[%s204 + $0x8] sm:$0xf]
    %v208 = vld [vmem:[%s204 + $0xc] sm:$0xf]
    %s209 = scalar_lea.vmem %s4, 3
    %v210 = vld [vmem:[%s209] sm:$0x1]
    %v212 = vperm.slane %v210, 0
    %v218 = vunpack.c.l.b16 %v205
    %v219 = vunpack.c.l.b16 %v206
    %v220 = vunpack.c.l.b16 %v207
    %v221 = vunpack.c.l.b16 %v208
    %v222 = vpack.c.b16 %v219, %v218
    %v223 = vpack.c.b16 %v221, %v220
    %226 = vmatpush.bf16.msra.mxu0 0
    %227 = vmatpush.bf16.msra.mxu0 0
    %228 = vmatpush.bf16.msra.mxu0 0
    %229 = vmatpush.bf16.msra.mxu0 0
    %230 = vmatpush.bf16.msra.mxu0 0
    %231 = vmatpush.bf16.msra.mxu0 0
    %232 = vmatpush.bf16.msra.mxu0 %v223
    %233 = vmatpush.bf16.msra.mxu0 %v222
    %234 = vmatmul.bf16.gmra.mxu0 %v116
    %v235 = vpop.f32.mrf.mxu0
    %v236 = vadd.f32 %v212, %v235
    %v237 = vpop.f32.mrf.mxu0
    %v238 = vadd.f32 %v212, %v237
    %239 = vdwg.mxu0
    %v240 = vpack.c.bf16 %v128, %v128
    %v241 = vpack.c.bf16 %v130, %v130
    %v242 = vpack.c.bf16 %v164, %v164
    %v243 = vpack.c.bf16 %v166, %v166
    %v244 = vpack.c.bf16 %v200, %v200
    %v245 = vpack.c.bf16 %v202, %v202
    %v246 = vpack.c.bf16 %v236, %v236
    %v247 = vpack.c.bf16 %v238, %v238
    %v249 = vunpack.c.l.b16 %v240
    %v250 = vpack.c.b16 %v249, %v249
    %251 = vrot.lane.b32.xlu0 %v250, 120
    %v252 = vpop.permute.xlu0 %251
    %vm253 = vcmask 64512
    %v255 = vsel %vm253, %v240, 0
    %v258 = vsel %vm253, %v252, 0
    %260 = vmatpush.bf16.xpose.msra.mxu0 0
    %261 = vmatpush.bf16.xpose.msra.mxu0 0
    %262 = vmatpush.bf16.xpose.msra.mxu0 0
    %263 = vmatpush.bf16.xpose.msra.mxu0 0
    %264 = vmatpush.bf16.xpose.msra.mxu0 0
    %265 = vmatpush.bf16.xpose.msra.mxu0 0
    %266 = vmatpush.bf16.xpose.msra.mxu0 0
    %267 = vmatpush.bf16.xpose.msra.mxu0 %v258
    %268 = vmatmul.bf16.gmra.mxu0 %v255
    %v269 = vpop.f32.mrf.mxu0
    %v270 = vadd.f32 0.0, %v269
    %v271 = vpop.f32.mrf.mxu0
    %272 = vdwg.mxu0
    %v274 = vunpack.c.l.b16 %v241
    %v275 = vpack.c.b16 %v274, %v274
    %276 = vrot.lane.b32.xlu0 %v275, 120
    %v277 = vpop.permute.xlu0 %276
    %v279 = vsel %vm253, %v241, 0
    %v282 = vsel %vm253, %v277, 0
    %284 = vmatpush.bf16.xpose.msra.mxu0 0
    %285 = vmatpush.bf16.xpose.msra.mxu0 0
    %286 = vmatpush.bf16.xpose.msra.mxu0 0
    %287 = vmatpush.bf16.xpose.msra.mxu0 0
    %288 = vmatpush.bf16.xpose.msra.mxu0 0
    %289 = vmatpush.bf16.xpose.msra.mxu0 0
    %290 = vmatpush.bf16.xpose.msra.mxu0 0
    %291 = vmatpush.bf16.xpose.msra.mxu0 %v282
    %292 = vmatmul.bf16.gmra.mxu0 %v279
    %v293 = vpop.f32.mrf.mxu0
    %v294 = vadd.f32 0.0, %v293
    %v295 = vpop.f32.mrf.mxu0
    %296 = vdwg.mxu0
    %v298 = vunpack.c.l.b16 %v242
    %v299 = vpack.c.b16 %v298, %v298
    %300 = vrot.lane.b32.xlu0 %v299, 120
    %v301 = vpop.permute.xlu0 %300
    %v303 = vsel %vm253, %v242, 0
    %v306 = vsel %vm253, %v301, 0
    %308 = vmatpush.bf16.xpose.msra.mxu0 0
    %309 = vmatpush.bf16.xpose.msra.mxu0 0
    %310 = vmatpush.bf16.xpose.msra.mxu0 0
    %311 = vmatpush.bf16.xpose.msra.mxu0 0
    %312 = vmatpush.bf16.xpose.msra.mxu0 0
    %313 = vmatpush.bf16.xpose.msra.mxu0 0
    %314 = vmatpush.bf16.xpose.msra.mxu0 0
    %315 = vmatpush.bf16.xpose.msra.mxu0 %v306
    %316 = vmatmul.bf16.gmra.mxu0 %v303
    %v317 = vpop.f32.mrf.mxu0
    %v318 = vadd.f32 0.0, %v317
    %v319 = vpop.f32.mrf.mxu0
    %320 = vdwg.mxu0
    %v322 = vunpack.c.l.b16 %v243
    %v323 = vpack.c.b16 %v322, %v322
    %324 = vrot.lane.b32.xlu0 %v323, 120
    %v325 = vpop.permute.xlu0 %324
    %v327 = vsel %vm253, %v243, 0
    %v330 = vsel %vm253, %v325, 0
    %332 = vmatpush.bf16.xpose.msra.mxu0 0
    %333 = vmatpush.bf16.xpose.msra.mxu0 0
    %334 = vmatpush.bf16.xpose.msra.mxu0 0
    %335 = vmatpush.bf16.xpose.msra.mxu0 0
    %336 = vmatpush.bf16.xpose.msra.mxu0 0
    %337 = vmatpush.bf16.xpose.msra.mxu0 0
    %338 = vmatpush.bf16.xpose.msra.mxu0 0
    %339 = vmatpush.bf16.xpose.msra.mxu0 %v330
    %340 = vmatmul.bf16.gmra.mxu0 %v327
    %v341 = vpop.f32.mrf.mxu0
    %v342 = vadd.f32 0.0, %v341
    %v343 = vpop.f32.mrf.mxu0
    %344 = vdwg.mxu0
    %v346 = vunpack.c.l.b16 %v244
    %v347 = vpack.c.b16 %v346, %v346
    %348 = vrot.lane.b32.xlu0 %v347, 120
    %v349 = vpop.permute.xlu0 %348
    %v351 = vsel %vm253, %v244, 0
    %v354 = vsel %vm253, %v349, 0
    %356 = vmatpush.bf16.xpose.msra.mxu0 0
    %357 = vmatpush.bf16.xpose.msra.mxu0 0
    %358 = vmatpush.bf16.xpose.msra.mxu0 0
    %359 = vmatpush.bf16.xpose.msra.mxu0 0
    %360 = vmatpush.bf16.xpose.msra.mxu0 0
    %361 = vmatpush.bf16.xpose.msra.mxu0 0
    %362 = vmatpush.bf16.xpose.msra.mxu0 0
    %363 = vmatpush.bf16.xpose.msra.mxu0 %v354
    %364 = vmatmul.bf16.gmra.mxu0 %v351
    %v365 = vpop.f32.mrf.mxu0
    %v366 = vadd.f32 0.0, %v365
    %v367 = vpop.f32.mrf.mxu0
    %368 = vdwg.mxu0
    %v370 = vunpack.c.l.b16 %v245
    %v371 = vpack.c.b16 %v370, %v370
    %372 = vrot.lane.b32.xlu0 %v371, 120
    %v373 = vpop.permute.xlu0 %372
    %v375 = vsel %vm253, %v245, 0
    %v378 = vsel %vm253, %v373, 0
    %380 = vmatpush.bf16.xpose.msra.mxu0 0
    %381 = vmatpush.bf16.xpose.msra.mxu0 0
    %382 = vmatpush.bf16.xpose.msra.mxu0 0
    %383 = vmatpush.bf16.xpose.msra.mxu0 0
    %384 = vmatpush.bf16.xpose.msra.mxu0 0
    %385 = vmatpush.bf16.xpose.msra.mxu0 0
    %386 = vmatpush.bf16.xpose.msra.mxu0 0
    %387 = vmatpush.bf16.xpose.msra.mxu0 %v378
    %388 = vmatmul.bf16.gmra.mxu0 %v375
    %v389 = vpop.f32.mrf.mxu0
    %v390 = vadd.f32 0.0, %v389
    %v391 = vpop.f32.mrf.mxu0
    %392 = vdwg.mxu0
    %v394 = vunpack.c.l.b16 %v246
    %v395 = vpack.c.b16 %v394, %v394
    %396 = vrot.lane.b32.xlu0 %v395, 120
    %v397 = vpop.permute.xlu0 %396
    %v399 = vsel %vm253, %v246, 0
    %v402 = vsel %vm253, %v397, 0
    %404 = vmatpush.bf16.xpose.msra.mxu0 0
    %405 = vmatpush.bf16.xpose.msra.mxu0 0
    %406 = vmatpush.bf16.xpose.msra.mxu0 0
    %407 = vmatpush.bf16.xpose.msra.mxu0 0
    %408 = vmatpush.bf16.xpose.msra.mxu0 0
    %409 = vmatpush.bf16.xpose.msra.mxu0 0
    %410 = vmatpush.bf16.xpose.msra.mxu0 0
    %411 = vmatpush.bf16.xpose.msra.mxu0 %v402
    %412 = vmatmul.bf16.gmra.mxu0 %v399
    %v413 = vpop.f32.mrf.mxu0
    %v414 = vadd.f32 0.0, %v413
    %v415 = vpop.f32.mrf.mxu0
    %416 = vdwg.mxu0
    %v418 = vunpack.c.l.b16 %v247
    %v419 = vpack.c.b16 %v418, %v418
    %420 = vrot.lane.b32.xlu0 %v419, 120
    %v421 = vpop.permute.xlu0 %420
    %v423 = vsel %vm253, %v247, 0
    %v426 = vsel %vm253, %v421, 0
    %428 = vmatpush.bf16.xpose.msra.mxu0 0
    %429 = vmatpush.bf16.xpose.msra.mxu0 0
    %430 = vmatpush.bf16.xpose.msra.mxu0 0
    %431 = vmatpush.bf16.xpose.msra.mxu0 0
    %432 = vmatpush.bf16.xpose.msra.mxu0 0
    %433 = vmatpush.bf16.xpose.msra.mxu0 0
    %434 = vmatpush.bf16.xpose.msra.mxu0 0
    %435 = vmatpush.bf16.xpose.msra.mxu0 %v426
    %436 = vmatmul.bf16.gmra.mxu0 %v423
    %v437 = vpop.f32.mrf.mxu0
    %v438 = vadd.f32 0.0, %v437
    %v439 = vpop.f32.mrf.mxu0
    %440 = vdwg.mxu0
    %v441 = vtanh.pop %v270
    %v442 = vtanh.pop %v294
    %v443 = vtanh.pop %v318
    %v444 = vtanh.pop %v342
    %v445 = vtanh.pop %v366
    %v446 = vtanh.pop %v390
    %v447 = vtanh.pop %v414
    %v448 = vtanh.pop %v438
    %v449 = vmul.f32 %v441, 30.0
    %v450 = vmul.f32 %v442, 30.0
    %v451 = vmul.f32 %v443, 30.0
    %v452 = vmul.f32 %v444, 30.0
    %v453 = vmul.f32 %v445, 30.0
    %v454 = vmul.f32 %v446, 30.0
    %v455 = vmul.f32 %v447, 30.0
    %v456 = vmul.f32 %v448, 30.0
    %v457 = vlaneseq
    %v458 = vshrl.u32 %v457, 7
    %v459 = vlaneseq
    %v460 = vand.u32 %v459, 127
    %vm461 = vcmp.ge.s32.totalorder %v458, %v460
    %v462 = vsel %vm461, 1, 0
    %vm463 = vcmp.eq.s32.totalorder %v462, 1
    %v464 = vsel %vm463, %v449, -inf
    %v465 = vsel %vm463, %v450, -inf
    %v466 = vsel %vm463, %v451, -inf
    %v467 = vsel %vm463, %v452, -inf
    %v468 = vsel %vm463, %v453, -inf
    %v469 = vsel %vm463, %v454, -inf
    %v470 = vsel %vm463, %v455, -inf
    %v471 = vsel %vm463, %v456, -inf
    %v472 = vmul.f32 %v464, 1.442695
    %v473 = vpow.pop %v472
    %v474 = vmul.f32 %v465, 1.442695
    %v475 = vpow.pop %v474
    %v476 = vmul.f32 %v466, 1.442695
    %v477 = vpow.pop %v476
    %v478 = vmul.f32 %v467, 1.442695
    %v479 = vpow.pop %v478
    %v480 = vmul.f32 %v468, 1.442695
    %v481 = vpow.pop %v480
    %v482 = vmul.f32 %v469, 1.442695
    %v483 = vpow.pop %v482
    %v484 = vmul.f32 %v470, 1.442695
    %v485 = vpow.pop %v484
    %v486 = vmul.f32 %v471, 1.442695
    %v487 = vpow.pop %v486
    %v488 = vsel %vm253, %v473, 0.0
    %489 = vadd.xlane.f32.xlu0 %v488
    %v490 = vpop.xlane.xlu0 %489
    %v491 = vsel %vm253, %v475, 0.0
    %492 = vadd.xlane.f32.xlu0 %v491
    %v493 = vpop.xlane.xlu0 %492
    %v494 = vsel %vm253, %v477, 0.0
    %495 = vadd.xlane.f32.xlu0 %v494
    %v496 = vpop.xlane.xlu0 %495
    %v497 = vsel %vm253, %v479, 0.0
    %498 = vadd.xlane.f32.xlu0 %v497
    %v499 = vpop.xlane.xlu0 %498
    %v500 = vsel %vm253, %v481, 0.0
    %501 = vadd.xlane.f32.xlu0 %v500
    %v502 = vpop.xlane.xlu0 %501
    %v503 = vsel %vm253, %v483, 0.0
    %504 = vadd.xlane.f32.xlu0 %v503
    %v505 = vpop.xlane.xlu0 %504
    %v506 = vsel %vm253, %v485, 0.0
    %507 = vadd.xlane.f32.xlu0 %v506
    %v508 = vpop.xlane.xlu0 %507
    %v509 = vsel %vm253, %v487, 0.0
    %510 = vadd.xlane.f32.xlu0 %v509
    %v511 = vpop.xlane.xlu0 %510
    %v512 = vrcp.pop %v490
    %v513 = vmul.f32 %v490, %v512
    %v514 = vsub.f32 1.0, %v513
    %v515 = vmul.f32 %v512, %v514
    %v516 = vadd.f32 %v512, %v515
    %vm517 = vweird.f32 %v490
    %vm518 = vweird.f32 %v512
    %vm519 = vmor %vm517, %vm518
    %v520 = vsel %vm519, %v512, %v516
    %v521 = vand.u32 2147483647, %v490
    %vm522 = vcmp.eq.f32.partialorder %v521, 8.507059e+37
    %v523 = vand.u32 %v490, 2147483648
    %v524 = vor.u32 1.1754944e-38, %v523
    %v525 = vsel %vm522, %v524, %v520
    %v526 = vrcp.pop %v493
    %v527 = vmul.f32 %v493, %v526
    %v528 = vsub.f32 1.0, %v527
    %v529 = vmul.f32 %v526, %v528
    %v530 = vadd.f32 %v526, %v529
    %vm531 = vweird.f32 %v493
    %vm532 = vweird.f32 %v526
    %vm533 = vmor %vm531, %vm532
    %v534 = vsel %vm533, %v526, %v530
    %v535 = vand.u32 2147483647, %v493
    %vm536 = vcmp.eq.f32.partialorder %v535, 8.507059e+37
    %v537 = vand.u32 %v493, 2147483648
    %v538 = vor.u32 1.1754944e-38, %v537
    %v539 = vsel %vm536, %v538, %v534
    %v540 = vrcp.pop %v496
    %v541 = vmul.f32 %v496, %v540
    %v542 = vsub.f32 1.0, %v541
    %v543 = vmul.f32 %v540, %v542
    %v544 = vadd.f32 %v540, %v543
    %vm545 = vweird.f32 %v496
    %vm546 = vweird.f32 %v540
    %vm547 = vmor %vm545, %vm546
    %v548 = vsel %vm547, %v540, %v544
    %v549 = vand.u32 2147483647, %v496
    %vm550 = vcmp.eq.f32.partialorder %v549, 8.507059e+37
    %v551 = vand.u32 %v496, 2147483648
    %v552 = vor.u32 1.1754944e-38, %v551
    %v553 = vsel %vm550, %v552, %v548
    %v554 = vrcp.pop %v499
    %v555 = vmul.f32 %v499, %v554
    %v556 = vsub.f32 1.0, %v555
    %v557 = vmul.f32 %v554, %v556
    %v558 = vadd.f32 %v554, %v557
    %vm559 = vweird.f32 %v499
    %vm560 = vweird.f32 %v554
    %vm561 = vmor %vm559, %vm560
    %v562 = vsel %vm561, %v554, %v558
    %v563 = vand.u32 2147483647, %v499
    %vm564 = vcmp.eq.f32.partialorder %v563, 8.507059e+37
    %v565 = vand.u32 %v499, 2147483648
    %v566 = vor.u32 1.1754944e-38, %v565
    %v567 = vsel %vm564, %v566, %v562
    %v568 = vrcp.pop %v502
    %v569 = vmul.f32 %v502, %v568
    %v570 = vsub.f32 1.0, %v569
    %v571 = vmul.f32 %v568, %v570
    %v572 = vadd.f32 %v568, %v571
    %vm573 = vweird.f32 %v502
    %vm574 = vweird.f32 %v568
    %vm575 = vmor %vm573, %vm574
    %v576 = vsel %vm575, %v568, %v572
    %v577 = vand.u32 2147483647, %v502
    %vm578 = vcmp.eq.f32.partialorder %v577, 8.507059e+37
    %v579 = vand.u32 %v502, 2147483648
    %v580 = vor.u32 1.1754944e-38, %v579
    %v581 = vsel %vm578, %v580, %v576
    %v582 = vrcp.pop %v505
    %v583 = vmul.f32 %v505, %v582
    %v584 = vsub.f32 1.0, %v583
    %v585 = vmul.f32 %v582, %v584
    %v586 = vadd.f32 %v582, %v585
    %vm587 = vweird.f32 %v505
    %vm588 = vweird.f32 %v582
    %vm589 = vmor %vm587, %vm588
    %v590 = vsel %vm589, %v582, %v586
    %v591 = vand.u32 2147483647, %v505
    %vm592 = vcmp.eq.f32.partialorder %v591, 8.507059e+37
    %v593 = vand.u32 %v505, 2147483648
    %v594 = vor.u32 1.1754944e-38, %v593
    %v595 = vsel %vm592, %v594, %v590
    %v596 = vrcp.pop %v508
    %v597 = vmul.f32 %v508, %v596
    %v598 = vsub.f32 1.0, %v597
    %v599 = vmul.f32 %v596, %v598
    %v600 = vadd.f32 %v596, %v599
    %vm601 = vweird.f32 %v508
    %vm602 = vweird.f32 %v596
    %vm603 = vmor %vm601, %vm602
    %v604 = vsel %vm603, %v596, %v600
    %v605 = vand.u32 2147483647, %v508
    %vm606 = vcmp.eq.f32.partialorder %v605, 8.507059e+37
    %v607 = vand.u32 %v508, 2147483648
    %v608 = vor.u32 1.1754944e-38, %v607
    %v609 = vsel %vm606, %v608, %v604
    %v610 = vrcp.pop %v511
    %v611 = vmul.f32 %v511, %v610
    %v612 = vsub.f32 1.0, %v611
    %v613 = vmul.f32 %v610, %v612
    %v614 = vadd.f32 %v610, %v613
    %vm615 = vweird.f32 %v511
    %vm616 = vweird.f32 %v610
    %vm617 = vmor %vm615, %vm616
    %v618 = vsel %vm617, %v610, %v614
    %v619 = vand.u32 2147483647, %v511
    %vm620 = vcmp.eq.f32.partialorder %v619, 8.507059e+37
    %v621 = vand.u32 %v511, 2147483648
    %v622 = vor.u32 1.1754944e-38, %v621
    %v623 = vsel %vm620, %v622, %v618
    %v624 = vmul.f32 %v473, %v525
    %v625 = vmul.f32 %v475, %v539
    %v626 = vmul.f32 %v477, %v553
    %v627 = vmul.f32 %v479, %v567
    %v628 = vmul.f32 %v481, %v581
    %v629 = vmul.f32 %v483, %v595
    %v630 = vmul.f32 %v485, %v609
    %v631 = vmul.f32 %v487, %v623
    %v632 = vpack.c.bf16 %v624, %v624
    %v633 = vpack.c.bf16 %v625, %v625
    %v634 = vpack.c.bf16 %v626, %v626
    %v635 = vpack.c.bf16 %v627, %v627
    %v636 = vpack.c.bf16 %v628, %v628
    %v637 = vpack.c.bf16 %v629, %v629
    %v638 = vpack.c.bf16 %v630, %v630
    %v639 = vpack.c.bf16 %v631, %v631
    %640 = vrot.lane.b32.xlu0 %v250, 112
    %v641 = vpop.permute.xlu0 %640
    %v643 = vsel %vm253, %v632, 0
    %vm645 = vcmask 1043456
    %v647 = vsel %vm645, %v641, 0
    %649 = vmatpush.bf16.msra.mxu0 0
    %650 = vmatpush.bf16.msra.mxu0 0
    %651 = vmatpush.bf16.msra.mxu0 0
    %652 = vmatpush.bf16.msra.mxu0 0
    %653 = vmatpush.bf16.msra.mxu0 0
    %654 = vmatpush.bf16.msra.mxu0 0
    %655 = vmatpush.bf16.msra.mxu0 0
    %656 = vmatpush.bf16.msra.mxu0 %v647
    %657 = vmatmul.bf16.gmra.mxu0 %v643
    %v658 = vpop.f32.mrf.mxu0
    %v659 = vadd.f32 0.0, %v658
    %v660 = vpop.f32.mrf.mxu0
    %661 = vdwg.mxu0
    %662 = vrot.lane.b32.xlu0 %v275, 112
    %v663 = vpop.permute.xlu0 %662
    %v665 = vsel %vm253, %v633, 0
    %v668 = vsel %vm645, %v663, 0
    %670 = vmatpush.bf16.msra.mxu0 0
    %671 = vmatpush.bf16.msra.mxu0 0
    %672 = vmatpush.bf16.msra.mxu0 0
    %673 = vmatpush.bf16.msra.mxu0 0
    %674 = vmatpush.bf16.msra.mxu0 0
    %675 = vmatpush.bf16.msra.mxu0 0
    %676 = vmatpush.bf16.msra.mxu0 0
    %677 = vmatpush.bf16.msra.mxu0 %v668
    %678 = vmatmul.bf16.gmra.mxu0 %v665
    %v679 = vpop.f32.mrf.mxu0
    %v680 = vadd.f32 0.0, %v679
    %v681 = vpop.f32.mrf.mxu0
    %682 = vdwg.mxu0
    %683 = vrot.lane.b32.xlu0 %v299, 112
    %v684 = vpop.permute.xlu0 %683
    %v686 = vsel %vm253, %v634, 0
    %v689 = vsel %vm645, %v684, 0
    %691 = vmatpush.bf16.msra.mxu0 0
    %692 = vmatpush.bf16.msra.mxu0 0
    %693 = vmatpush.bf16.msra.mxu0 0
    %694 = vmatpush.bf16.msra.mxu0 0
    %695 = vmatpush.bf16.msra.mxu0 0
    %696 = vmatpush.bf16.msra.mxu0 0
    %697 = vmatpush.bf16.msra.mxu0 0
    %698 = vmatpush.bf16.msra.mxu0 %v689
    %699 = vmatmul.bf16.gmra.mxu0 %v686
    %v700 = vpop.f32.mrf.mxu0
    %v701 = vadd.f32 0.0, %v700
    %v702 = vpop.f32.mrf.mxu0
    %703 = vdwg.mxu0
    %704 = vrot.lane.b32.xlu0 %v323, 112
    %v705 = vpop.permute.xlu0 %704
    %v707 = vsel %vm253, %v635, 0
    %v710 = vsel %vm645, %v705, 0
    %712 = vmatpush.bf16.msra.mxu0 0
    %713 = vmatpush.bf16.msra.mxu0 0
    %714 = vmatpush.bf16.msra.mxu0 0
    %715 = vmatpush.bf16.msra.mxu0 0
    %716 = vmatpush.bf16.msra.mxu0 0
    %717 = vmatpush.bf16.msra.mxu0 0
    %718 = vmatpush.bf16.msra.mxu0 0
    %719 = vmatpush.bf16.msra.mxu0 %v710
    %720 = vmatmul.bf16.gmra.mxu0 %v707
    %v721 = vpop.f32.mrf.mxu0
    %v722 = vadd.f32 0.0, %v721
    %v723 = vpop.f32.mrf.mxu0
    %724 = vdwg.mxu0
    %725 = vrot.lane.b32.xlu0 %v347, 112
    %v726 = vpop.permute.xlu0 %725
    %v728 = vsel %vm253, %v636, 0
    %v731 = vsel %vm645, %v726, 0
    %733 = vmatpush.bf16.msra.mxu0 0
    %734 = vmatpush.bf16.msra.mxu0 0
    %735 = vmatpush.bf16.msra.mxu0 0
    %736 = vmatpush.bf16.msra.mxu0 0
    %737 = vmatpush.bf16.msra.mxu0 0
    %738 = vmatpush.bf16.msra.mxu0 0
    %739 = vmatpush.bf16.msra.mxu0 0
    %740 = vmatpush.bf16.msra.mxu0 %v731
    %741 = vmatmul.bf16.gmra.mxu0 %v728
    %v742 = vpop.f32.mrf.mxu0
    %v743 = vadd.f32 0.0, %v742
    %v744 = vpop.f32.mrf.mxu0
    %745 = vdwg.mxu0
    %746 = vrot.lane.b32.xlu0 %v371, 112
    %v747 = vpop.permute.xlu0 %746
    %v749 = vsel %vm253, %v637, 0
    %v752 = vsel %vm645, %v747, 0
    %754 = vmatpush.bf16.msra.mxu0 0
    %755 = vmatpush.bf16.msra.mxu0 0
    %756 = vmatpush.bf16.msra.mxu0 0
    %757 = vmatpush.bf16.msra.mxu0 0
    %758 = vmatpush.bf16.msra.mxu0 0
    %759 = vmatpush.bf16.msra.mxu0 0
    %760 = vmatpush.bf16.msra.mxu0 0
    %761 = vmatpush.bf16.msra.mxu0 %v752
    %762 = vmatmul.bf16.gmra.mxu0 %v749
    %v763 = vpop.f32.mrf.mxu0
    %v764 = vadd.f32 0.0, %v763
    %v765 = vpop.f32.mrf.mxu0
    %766 = vdwg.mxu0
    %767 = vrot.lane.b32.xlu0 %v395, 112
    %v768 = vpop.permute.xlu0 %767
    %v770 = vsel %vm253, %v638, 0
    %v773 = vsel %vm645, %v768, 0
    %775 = vmatpush.bf16.msra.mxu0 0
    %776 = vmatpush.bf16.msra.mxu0 0
    %777 = vmatpush.bf16.msra.mxu0 0
    %778 = vmatpush.bf16.msra.mxu0 0
    %779 = vmatpush.bf16.msra.mxu0 0
    %780 = vmatpush.bf16.msra.mxu0 0
    %781 = vmatpush.bf16.msra.mxu0 0
    %782 = vmatpush.bf16.msra.mxu0 %v773
    %783 = vmatmul.bf16.gmra.mxu0 %v770
    %v784 = vpop.f32.mrf.mxu0
    %v785 = vadd.f32 0.0, %v784
    %v786 = vpop.f32.mrf.mxu0
    %787 = vdwg.mxu0
    %788 = vrot.lane.b32.xlu0 %v419, 112
    %v789 = vpop.permute.xlu0 %788
    %v791 = vsel %vm253, %v639, 0
    %v794 = vsel %vm645, %v789, 0
    %796 = vmatpush.bf16.msra.mxu0 0
    %797 = vmatpush.bf16.msra.mxu0 0
    %798 = vmatpush.bf16.msra.mxu0 0
    %799 = vmatpush.bf16.msra.mxu0 0
    %800 = vmatpush.bf16.msra.mxu0 0
    %801 = vmatpush.bf16.msra.mxu0 0
    %802 = vmatpush.bf16.msra.mxu0 0
    %803 = vmatpush.bf16.msra.mxu0 %v794
    %804 = vmatmul.bf16.gmra.mxu0 %v791
    %v805 = vpop.f32.mrf.mxu0
    %v806 = vadd.f32 0.0, %v805
    %v807 = vpop.f32.mrf.mxu0
    %808 = vdwg.mxu0
    %811 = vrot.lane.b32.xlu0 %v701, 8
    %v812 = vpop.permute.xlu0 %811
    %813 = vrot.lane.b32.xlu0 %v722, 8
    %v814 = vpop.permute.xlu0 %813
    %819 = vrot.lane.b32.xlu0 %v743, 16
    %v820 = vpop.permute.xlu0 %819
    %821 = vrot.lane.b32.xlu0 %v764, 16
    %v822 = vpop.permute.xlu0 %821
    %827 = vrot.lane.b32.xlu0 %v785, 24
    %v828 = vpop.permute.xlu0 %827
    %829 = vrot.lane.b32.xlu0 %v806, 24
    %v830 = vpop.permute.xlu0 %829
    %v833 = vsel %vm253, %v659, %v812
    %v834 = vsel %vm253, %v680, %v814
    %vm835 = vcmask 130048
    %v836 = vsel %vm835, %v833, %v820
    %v837 = vsel %vm835, %v834, %v822
    %vm838 = vcmask 195584
    %v839 = vsel %vm838, %v836, %v828
    %v840 = vsel %vm838, %v837, %v830
    %v841 = vpack.c.bf16 %v840, %v839
    %v842 = vld [vmem:[%s5] sm:$0xf]
    %v843 = vld [vmem:[%s5 + $0x4] sm:$0xf]
    %v844 = vld [vmem:[%s5 + $0x8] sm:$0xf]
    %v845 = vld [vmem:[%s5 + $0xc] sm:$0xf]
    %v846 = vld [vmem:[%s6] sm:$0x1]
    %v848 = vperm.slane %v846, 0
    %v854 = vunpack.c.l.b16 %v842
    %v855 = vunpack.c.l.b16 %v843
    %v856 = vunpack.c.l.b16 %v844
    %v857 = vunpack.c.l.b16 %v845
    %v858 = vpack.c.b16 %v855, %v854
    %v859 = vpack.c.b16 %v857, %v856
    %v863 = vsel %vm30, %v841, 0
    %865 = vmatpush.bf16.msra.mxu0 0
    %866 = vmatpush.bf16.msra.mxu0 0
    %867 = vmatpush.bf16.msra.mxu0 0
    %868 = vmatpush.bf16.msra.mxu0 0
    %869 = vmatpush.bf16.msra.mxu0 0
    %870 = vmatpush.bf16.msra.mxu0 0
    %871 = vmatpush.bf16.msra.mxu0 %v859
    %872 = vmatpush.bf16.msra.mxu0 %v858
    %873 = vmatmul.bf16.gmra.mxu0 %v863
    %v874 = vpop.f32.mrf.mxu0
    %v875 = vadd.f32 %v848, %v874
    %v876 = vpop.f32.mrf.mxu0
    %v877 = vadd.f32 %v848, %v876
    %878 = vdwg.mxu0
    %879 = vst.msk [vmem:[#allocation2] sm:$0xff] %vm30, %v875
    %880 = vst.msk [vmem:[#allocation2 + $0x8] sm:$0xff] %vm30, %v877
    // Predicated region
    $region30: #{mha_forward.1} parent=1 // pred_check
      _
    $region31: #{mha_forward.1} parent=1 // pred_check_branch
      %882 = sbr.rel (0) target = $region33
    $region32: #{mha_forward.1} parent=1 // pred_region
      %884 = vsyncadd [#allocation3], 0
      %s885 = sshll.u32 [#allocation2], 4
      %s886 = int_to_ptr.vmem [resolvable:$true] %s885
      %s887 = sshll.u32 %s7, 4
      %s888 = int_to_ptr.hbm [resolvable:$true] %s887
      %893 = dma.vmem_to_hbm [thread:$0]  %s886, 256, %s888, [#allocation3], 128, 128, 8
    $region33: #{mha_forward.1} parent=1 // pred_fallthru
      _
    // Predicated region
    $region34: #{mha_forward.1} parent=1 // pred_check
      _
    $region35: #{mha_forward.1} parent=1 // pred_check_branch
      %895 = sbr.rel (0) target = $region37
    $region36: #{mha_forward.1} parent=1 // pred_region
      %897 = dma.done [#allocation3], 256
    $region37: #{mha_forward.1} parent=1 // pred_fallthru
      _
    %898 = vsyncpa [#allocation3], 1

</llo_original>
